<compile_context>
chip_gen: v5e
topology: v5e:2x2
jax: 0.10.0
libtpu: 0.0.40
codegen_flags: <defaults>
</compile_context>

<pallas_src>
import jax
import jax.numpy as jnp
from jax.experimental import pallas as pl
from jax.experimental.pallas import tpu as pltpu

HIDDEN_SIZE = 128      # module global `hidden_size`
NUM_CLASSES = 3        # module global `num_classes`
OUT_PAD = 8            # num_classes rounded up to one sublane (sliced back to 3)


def _round_up(x: int, m: int) -> int:
    return ((x + m - 1) // m) * m


# ---- Pallas kernel: single folded Linear (matmul + bias) -------------------
def stance_kernel(x_ref, w_ref, b_ref, out_ref):
    y = jnp.dot(x_ref[...], w_ref[...],
                preferred_element_type=jnp.float32) + b_ref[...]
    out_ref[...] = y.astype(out_ref.dtype)


# ---- one-time weight prep: fold fc1+fc2, pad to OUT_PAD lanes ---------------
def fold_params(params):
    """Fold fc1 and fc2 into one Linear (exact: no nonlinearity between them).

    Returns (w_folded [128, OUT_PAD], b_folded [1, OUT_PAD]) — compute once and
    reuse across forward calls.
    """
    w = params["fc1_w"] @ params["fc2_w"]                          # [128, 3]
    b = params["fc1_b"] @ params["fc2_w"] + params["fc2_b"]        # [1, 3]
    w = jnp.pad(w, ((0, 0), (0, OUT_PAD - NUM_CLASSES)))
    b = jnp.pad(b, ((0, 0), (0, OUT_PAD - NUM_CLASSES)))
    return w.astype(jnp.float32), b.astype(jnp.float32)


# ---- forward ----------------------------------------------------------------
def stance_forward(rational, w_folded, b_folded, *, tile_m: int = 1024):
    """rational: [B, HIDDEN_SIZE] float32 -> [B, NUM_CLASSES] float32."""
    B, H = rational.shape
    assert H == HIDDEN_SIZE

    # Row tile: sublane-aligned, at most tile_m, and chosen so large batches
    # yield >= 2 grid steps (both v7x TensorCores engage with "parallel").
    tm = min(tile_m, max(8, _round_up(pl.cdiv(B, 2), 8)))
    Bp = _round_up(B, tm)
    x_p = jnp.pad(rational, ((0, Bp - B), (0, 0))) if Bp != B else rational

    grid = (Bp // tm,)
    out_padded = pl.pallas_call(
        stance_kernel,
        out_shape=jax.ShapeDtypeStruct((Bp, OUT_PAD), jnp.float32),
        grid=grid,
        in_specs=[
            pl.BlockSpec((tm, HIDDEN_SIZE), lambda i: (i, 0)),        # x tile
            pl.BlockSpec((HIDDEN_SIZE, OUT_PAD), lambda i: (0, 0)),   # folded W
            pl.BlockSpec((1, OUT_PAD), lambda i: (0, 0)),             # folded b
        ],
        out_specs=pl.BlockSpec((tm, OUT_PAD), lambda i: (i, 0)),
        compiler_params=pltpu.CompilerParams(
            dimension_semantics=("parallel",)),
    )(x_p, w_folded, b_folded)

    return out_padded[:B, :NUM_CLASSES]


# ---- deterministic parameter init (weights stored transposed: [in, out]) ---
def init_params(key):
    k1, k2 = jax.random.split(key, 2)
    s = 0.05
    return {
        "fc1_w": (s * jax.random.normal(k1, (HIDDEN_SIZE, HIDDEN_SIZE))).astype(jnp.float32),
        "fc1_b": jnp.zeros((1, HIDDEN_SIZE), jnp.float32),
        "fc2_w": (s * jax.random.normal(k2, (HIDDEN_SIZE, NUM_CLASSES))).astype(jnp.float32),
        "fc2_b": jnp.zeros((1, NUM_CLASSES), jnp.float32),
    }


def reference_forward(rational, params):
    """Pure-JAX reference mirroring the PyTorch forward (two Linears)."""
    h = rational @ params["fc1_w"] + params["fc1_b"]
    return h @ params["fc2_w"] + params["fc2_b"]


if __name__ == "__main__":
    key = jax.random.PRNGKey(0)
    kp, kx = jax.random.split(key, 2)
    params = init_params(kp)
    w_folded, b_folded = fold_params(params)          # one-time prep

    B = 8  # small example batch; kernel tiles/pads arbitrary batch sizes
    rational = jax.random.normal(kx, (B, HIDDEN_SIZE), dtype=jnp.float32)

    logits = stance_forward(rational, w_folded, b_folded)
    logits = jax.block_until_ready(logits)

    assert logits.shape == (B, NUM_CLASSES) and logits.dtype == jnp.float32
    ref = reference_forward(rational, params)
    assert jnp.allclose(logits, ref, atol=1e-4, rtol=1e-4)
    print("KERNEL_OK")
</pallas_src>

<mosaic_0001>
module attributes {stable_mosaic.version = 11 : i64} {
  func.func @stance_kernel(%arg0: i32, %arg1: memref<8x128xf32, #tpu.memory_space<vmem>>, %arg2: memref<128x8xf32, #tpu.memory_space<vmem>>, %arg3: memref<1x8xf32, #tpu.memory_space<vmem>>, %arg4: memref<8x8xf32, #tpu.memory_space<vmem>>) attributes {dimension_semantics = [#tpu.dimension_semantics<parallel>], iteration_bounds = array<i64: 1>, scalar_prefetch = 0 : i64, scratch_operands = 0 : i64, tpu.core_type = #tpu.core_type<tc>, window_params = [{transform_indices = @transform_0, window_bounds = array<i64: 8, 128>}, {pipeline_mode = #tpu.pipeline_mode<synchronous>, transform_indices = @transform_1, window_bounds = array<i64: 128, 8>}, {pipeline_mode = #tpu.pipeline_mode<synchronous>, transform_indices = @transform_2, window_bounds = array<i64: 1, 8>}, {transform_indices = @transform_3, window_bounds = array<i64: 8, 8>}]} {
    %c0 = arith.constant 0 : index
    %c0_0 = arith.constant 0 : index
    %0 = vector.load %arg1[%c0, %c0_0] : memref<8x128xf32, #tpu.memory_space<vmem>>, vector<8x128xf32>
    %c0_1 = arith.constant 0 : index
    %c0_2 = arith.constant 0 : index
    %1 = vector.load %arg2[%c0_1, %c0_2] : memref<128x8xf32, #tpu.memory_space<vmem>>, vector<128x8xf32>
    %cst = arith.constant dense<0.000000e+00> : vector<8x8xf32>
    %2 = tpu.matmul %0, %1, %cst {dimension_numbers = #tpu.dot_dimension_numbers<[1], [0], [0], [1], [0, 0, 1, 1], [], []>} : vector<8x128xf32>, vector<128x8xf32>, vector<8x8xf32> -> vector<8x8xf32>
    %c0_3 = arith.constant 0 : index
    %c0_4 = arith.constant 0 : index
    %3 = vector.load %arg3[%c0_3, %c0_4] : memref<1x8xf32, #tpu.memory_space<vmem>>, vector<1x8xf32>
    %4 = vector.broadcast %3 : vector<1x8xf32> to vector<8x8xf32>
    %5 = arith.addf %2, %4 : vector<8x8xf32>
    %c0_5 = arith.constant 0 : index
    %c0_6 = arith.constant 0 : index
    %6 = vector.load %arg4[%c0_5, %c0_6] : memref<8x8xf32, #tpu.memory_space<vmem>>, vector<8x8xf32>
    tpu.vector_store %arg4[%c0_5, %c0_6], %5 {strides = array<i32>} : memref<8x8xf32, #tpu.memory_space<vmem>>, vector<8x8xf32>,
    return
  }
  func.func @transform_0(%arg0: i32) -> (i32, i32) {
    %c0_i32 = arith.constant 0 : i32
    %c0_i32_0 = arith.constant 0 : i32
    return %arg0, %c0_i32 : i32, i32
  }
  func.func @transform_1(%arg0: i32) -> (i32, i32) {
    %c0_i32 = arith.constant 0 : i32
    %c0_i32_0 = arith.constant 0 : i32
    %c0_i32_1 = arith.constant 0 : i32
    return %c0_i32, %c0_i32_0 : i32, i32
  }
  func.func @transform_2(%arg0: i32) -> (i32, i32) {
    %c0_i32 = arith.constant 0 : i32
    %c0_i32_0 = arith.constant 0 : i32
    %c0_i32_1 = arith.constant 0 : i32
    return %c0_i32, %c0_i32_0 : i32, i32
  }
  func.func @transform_3(%arg0: i32) -> (i32, i32) {
    %c0_i32 = arith.constant 0 : i32
    %c0_i32_0 = arith.constant 0 : i32
    return %arg0, %c0_i32 : i32, i32
  }
}

</mosaic_0001>

<llo_original>
// kernel: tpu_custom_call.1
$region0: #{tpu_custom_call.1}
  #allocation0 [shape = 'u32[]', space=smem, size = 0x4, offset = 0x4, fixed_abs, tag = 'smem constant byte address 0x4 - core index']
  #allocation1 [shape = 'u32[72,128]{1,0:T(1,128)}', space=vmem, size = 0x9000, scoped, tag = 'internal scratch']
  %s0 = inlined_call_operand.vmem [shape: f32[8,128], index: 0, kind: input, shape index: {}]
  %s1 = inlined_call_operand.vmem [shape: f32[128,8], index: 1, kind: input, shape index: {}]
  %s2 = inlined_call_operand.vmem [shape: f32[1,8], index: 2, kind: input, shape index: {}]
  %s3 = inlined_call_operand.hbm [shape: f32[8,8], index: 3, kind: output, shape index: {}]
  %s4 = sld [smem:[#allocation0]]
  $region22: #{tpu_custom_call.1} parent=0
    _
  %s6 = ssub.s32 1, %s4
  %s7 = scalar_select 0, %s6, %s4
  $region1: #{tpu_custom_call.1} parent=0
    #allocation2 [shape = 'u8[4096]{0}', space=vmem, size = 0x1000, scoped, tag = 'output window, operand 0, single buffered']
    #allocation3 [shape = 's32[1]{0}', space=sflag, size = 0x4, scoped, tag = 'scoped memory for tpu_custom_call.1']
    %8 = vsyncpa [#allocation3], 0
    // Predicated region
    $region2: #{tpu_custom_call.1} parent=1 // pred_check
      _
    $region3: #{tpu_custom_call.1} parent=1 // pred_check_branch
      %10 = sbr.rel (0) target = $region5
    $region4: #{tpu_custom_call.1} parent=1 // pred_region
      _
    $region5: #{tpu_custom_call.1} parent=1 // pred_fallthru
      _
    // Predicated region
    $region6: #{tpu_custom_call.1} parent=1 // pred_check
      _
    $region7: #{tpu_custom_call.1} parent=1 // pred_check_branch
      %12 = sbr.rel (0) target = $region9
    $region8: #{tpu_custom_call.1} parent=1 // pred_region
      _
    $region9: #{tpu_custom_call.1} parent=1 // pred_fallthru
      _
    // Predicated region
    $region10: #{tpu_custom_call.1} parent=1 // pred_check
      _
    $region11: #{tpu_custom_call.1} parent=1 // pred_check_branch
      %14 = sbr.rel (0) target = $region13
    $region12: #{tpu_custom_call.1} parent=1 // pred_region
      _
    $region13: #{tpu_custom_call.1} parent=1 // pred_fallthru
      _
    %v15 = vld [vmem:[%s0] sm:$0xff]
    %v16 = vld [vmem:[%s1] sm:$0xff]
    %v17 = vld [vmem:[%s1 + $0x8] sm:$0xff]
    %v18 = vld [vmem:[%s1 + $0x10] sm:$0xff]
    %v19 = vld [vmem:[%s1 + $0x18] sm:$0xff]
    %v20 = vld [vmem:[%s1 + $0x20] sm:$0xff]
    %v21 = vld [vmem:[%s1 + $0x28] sm:$0xff]
    %v22 = vld [vmem:[%s1 + $0x30] sm:$0xff]
    %v23 = vld [vmem:[%s1 + $0x38] sm:$0xff]
    %v24 = vld [vmem:[%s1 + $0x40] sm:$0xff]
    %v25 = vld [vmem:[%s1 + $0x48] sm:$0xff]
    %v26 = vld [vmem:[%s1 + $0x50] sm:$0xff]
    %v27 = vld [vmem:[%s1 + $0x58] sm:$0xff]
    %v28 = vld [vmem:[%s1 + $0x60] sm:$0xff]
    %v29 = vld [vmem:[%s1 + $0x68] sm:$0xff]
    %v30 = vld [vmem:[%s1 + $0x70] sm:$0xff]
    %v31 = vld [vmem:[%s1 + $0x78] sm:$0xff]
    %v32 = vld [vmem:[%s2] sm:$0x1]
    %v34 = vperm.slane %v32, 0
    %36 = vmatpush.msra.mxu0 %v31
    %37 = vmatpush.msra.mxu0 %v30
    %38 = vmatpush.msra.mxu0 %v29
    %39 = vmatpush.msra.mxu0 %v28
    %40 = vmatpush.msra.mxu0 %v27
    %41 = vmatpush.msra.mxu0 %v26
    %42 = vmatpush.msra.mxu0 %v25
    %43 = vmatpush.msra.mxu0 %v24
    %44 = vmatpush.msra.mxu0 %v23
    %45 = vmatpush.msra.mxu0 %v22
    %46 = vmatpush.msra.mxu0 %v21
    %47 = vmatpush.msra.mxu0 %v20
    %48 = vmatpush.msra.mxu0 %v19
    %49 = vmatpush.msra.mxu0 %v18
    %50 = vmatpush.msra.mxu0 %v17
    %51 = vmatpush.msra.mxu0 %v16
    %52 = vmatmul.f32.gmra.mxu0 %v15
    %v53 = vpop.f32.mrf.mxu0
    %v54 = vadd.f32 %v34, %v53
    %55 = vdwg.mxu0
    %vm56 = vcmask 64512
    %57 = vst.msk [vmem:[#allocation2] sm:$0xff] %vm56, %v54
    // Predicated region
    $region14: #{tpu_custom_call.1} parent=1 // pred_check
      _
    $region15: #{tpu_custom_call.1} parent=1 // pred_check_branch
      %59 = sbr.rel (0) target = $region17
    $region16: #{tpu_custom_call.1} parent=1 // pred_region
      %61 = vsyncadd [#allocation3], 0
      %s63 = sshll.u32 [#allocation2], 4
      %s64 = int_to_ptr.vmem [resolvable:$true] %s63
      %s65 = sshll.u32 %s3, 4
      %s66 = int_to_ptr.hbm [resolvable:$true] %s65
      %68 = dma.vmem_to_hbm [thread:$0]  %s64, 128, %s66, [#allocation3]
    $region17: #{tpu_custom_call.1} parent=1 // pred_fallthru
      _
    // Predicated region
    $region18: #{tpu_custom_call.1} parent=1 // pred_check
      _
    $region19: #{tpu_custom_call.1} parent=1 // pred_check_branch
      %70 = sbr.rel (0) target = $region21
    $region20: #{tpu_custom_call.1} parent=1 // pred_region
      %72 = dma.done [#allocation3], 128
    $region21: #{tpu_custom_call.1} parent=1 // pred_fallthru
      _
    %73 = vsyncpa [#allocation3], 1

</llo_original>
